<compile_context>
chip_gen: v6e
topology: v6e:2x2x1
jax: 0.10.0
libtpu: 0.0.40
codegen_flags: <defaults>
</compile_context>

<pallas_src>
import functools

import jax
import jax.numpy as jnp
from jax.experimental import pallas as pl
from jax.experimental.pallas import tpu as pltpu


def _combo_loss_kernel(logits_ref, tgt_ref, out_ref,
                       ce_acc, inter_acc, union_acc,
                       *, w_ce, w_dice, smooth, total_pixels, hw, block_pix,
                       needs_mask, num_classes):
    n = pl.program_id(0)
    p = pl.program_id(1)

    @pl.when(jnp.logical_and(n == 0, p == 0))
    def _():
        ce_acc[...] = jnp.zeros_like(ce_acc)
        inter_acc[...] = jnp.zeros_like(inter_acc)
        union_acc[...] = jnp.zeros_like(union_acc)

    x_raw = logits_ref[...].astype(jnp.float32)      # (C, TP) classes x pixels
    tgt = tgt_ref[...].astype(jnp.int32)             # (1, TP)
    cls = jax.lax.broadcasted_iota(jnp.int32, (num_classes, block_pix), 0)

    def accumulate(masked):
        if masked:
            pix = (jax.lax.broadcasted_iota(jnp.int32, (1, block_pix), 1)
                   + p * block_pix)                  # global pixel index
            valid = pix < hw                         # (1, TP) bool
            validf = valid.astype(jnp.float32)
            # zero padded columns -> finite softmax on garbage tail
            x = jnp.where(valid, x_raw, jnp.float32(0.0))
            onehot = jnp.logical_and(cls == tgt, valid).astype(jnp.float32)
        else:
            x = x_raw
            onehot = (cls == tgt).astype(jnp.float32)

        # numerically stable softmax over the class (sublane) axis,
        # exp computed exactly once per step
        m = jnp.max(x, axis=0, keepdims=True)        # (1, TP) sublane reduce
        shifted = x - m
        e = jnp.exp(shifted)                         # (C, TP) single EUP pass
        denom = jnp.sum(e, axis=0, keepdims=True)    # (1, TP)
        inv = pl.reciprocal(denom)                   # exact (tolerance-safe)
        ld = jnp.log(denom)                          # (1, TP)
        if masked:
            inv = inv * validf                       # masks probs via (1,TP)
            ld = ld * validf
        probs = e * inv                              # (C, TP)

        # CE per pixel in log-sum-exp form: log(sum e) - shifted[target]
        ce_pix = ld - jnp.sum(onehot * shifted, axis=0, keepdims=True)

        # per-step XLU reductions -> tiny accumulators
        ce_acc[...] = ce_acc[...] + jnp.sum(ce_pix)
        inter_acc[...] = inter_acc[...] + jnp.sum(
            probs * onehot, axis=1, keepdims=True)           # (C, 1)
        union_acc[...] = union_acc[...] + jnp.sum(
            probs + onehot, axis=1, keepdims=True)           # (C, 1)

    if needs_mask:
        is_tail = p == pl.num_programs(1) - 1

        @pl.when(jnp.logical_not(is_tail))
        def _():
            accumulate(masked=False)

        @pl.when(is_tail)
        def _():
            accumulate(masked=True)
    else:
        accumulate(masked=False)

    is_last = jnp.logical_and(n == pl.num_programs(0) - 1,
                              p == pl.num_programs(1) - 1)

    @pl.when(is_last)
    def _():
        dice = (2.0 * inter_acc[...] + smooth) / (union_acc[...] + smooth)
        dice_loss = 1.0 - jnp.sum(dice) / jnp.float32(num_classes)
        ce_loss = ce_acc[...] / jnp.float32(total_pixels)        # (1, 1)
        out_ref[...] = (w_ce * ce_loss + w_dice * dice_loss).astype(jnp.float32)


def combo_loss(logits_nchw, targets_nhw, *, weight_ce=0.2, weight_dice=0.8,
               smooth=1e-6, max_block_pix=262144):
    """ComboLoss forward. logits: (N, C, H, W) float; targets: (N, H, W) int.

    Logits may be bf16 or f32 (upcast happens in-register inside the kernel).
    """
    N, C, H, W = logits_nchw.shape
    HW = H * W

    # free reshapes only (no transpose): classes on sublanes, pixels on lanes
    logits_r = jnp.reshape(logits_nchw, (N, C, HW))
    tgt_r = jnp.reshape(targets_nhw, (N, 1, HW))

    if HW <= max_block_pix:
        block_pix = HW                  # full row; any size allowed
    else:
        block_pix = max_block_pix       # must be a multiple of 128
    num_pblocks = pl.cdiv(HW, block_pix)
    needs_mask = (HW % block_pix) != 0
    total_pixels = N * HW

    kernel = functools.partial(
        _combo_loss_kernel,
        w_ce=float(weight_ce),
        w_dice=float(weight_dice),
        smooth=float(smooth),
        total_pixels=total_pixels,
        hw=HW,
        block_pix=block_pix,
        needs_mask=needs_mask,
        num_classes=C,
    )

    out = pl.pallas_call(
        kernel,
        out_shape=jax.ShapeDtypeStruct((1, 1), jnp.float32),
        grid_spec=pltpu.PrefetchScalarGridSpec(
            num_scalar_prefetch=0,
            grid=(N, num_pblocks),
            in_specs=[
                pl.BlockSpec((None, C, block_pix), lambda n, p: (n, 0, p)),
                pl.BlockSpec((None, 1, block_pix), lambda n, p: (n, 0, p)),
            ],
            out_specs=pl.BlockSpec((1, 1), lambda n, p: (0, 0)),
            scratch_shapes=[
                pltpu.VMEM((1, 1), jnp.float32),   # CE sum
                pltpu.VMEM((C, 1), jnp.float32),   # per-class intersection
                pltpu.VMEM((C, 1), jnp.float32),   # per-class union
            ],
        ),
        compiler_params=pltpu.CompilerParams(
            dimension_semantics=("arbitrary", "arbitrary")),
    )(logits_r, tgt_r)
    return out[0, 0]


def _combo_loss_ref(logits_nchw, targets_nhw, weight_ce=0.2, weight_dice=0.8,
                    smooth=1e-6):
    # pure-JAX reference mirroring the PyTorch module
    N, C, H, W = logits_nchw.shape
    logp = jax.nn.log_softmax(logits_nchw.astype(jnp.float32), axis=1)
    onehot = jax.nn.one_hot(targets_nhw, C, axis=1, dtype=jnp.float32)
    ce = -jnp.mean(jnp.sum(onehot * logp, axis=1))
    probs = jax.nn.softmax(logits_nchw.astype(jnp.float32), axis=1)
    inter = jnp.sum(probs * onehot, axis=(0, 2, 3))
    union = jnp.sum(probs, axis=(0, 2, 3)) + jnp.sum(onehot, axis=(0, 2, 3))
    dice = (2.0 * inter + smooth) / (union + smooth)
    dice_loss = jnp.mean(1.0 - dice)
    return weight_ce * ce + weight_dice * dice_loss


if __name__ == "__main__":
    key = jax.random.PRNGKey(0)
    k_logits, k_tgt, k_logits2, k_tgt2 = jax.random.split(key, 4)

    # Test 1: single-block-per-image path (grid = (N, 1), unmasked fast path)
    N, C, H, W = 2, 4, 16, 16
    logits = jax.random.normal(k_logits, (N, C, H, W), dtype=jnp.float32)
    targets = jax.random.randint(k_tgt, (N, H, W), 0, C, dtype=jnp.int32)

    loss = jax.block_until_ready(combo_loss(logits, targets))
    ref = _combo_loss_ref(logits, targets)
    assert jnp.allclose(loss, ref, atol=1e-5, rtol=1e-5), (loss, ref)

    # Test 2: multi-block per image with a masked tail (HW=324, block=128)
    N2, C2, H2, W2 = 1, 4, 18, 18
    logits2 = jax.random.normal(k_logits2, (N2, C2, H2, W2), dtype=jnp.float32)
    targets2 = jax.random.randint(k_tgt2, (N2, H2, W2), 0, C2, dtype=jnp.int32)

    loss2 = jax.block_until_ready(
        combo_loss(logits2, targets2, max_block_pix=128))
    ref2 = _combo_loss_ref(logits2, targets2)
    assert jnp.allclose(loss2, ref2, atol=1e-5, rtol=1e-5), (loss2, ref2)

    print("KERNEL_OK")
</pallas_src>

<mosaic_0001>
module attributes {stable_mosaic.version = 11 : i64} {
  func.func @_combo_loss_kernel(%arg0: i32, %arg1: i32, %arg2: memref<1x4x256xf32, #tpu.memory_space<vmem>>, %arg3: memref<1x1x256xi32, #tpu.memory_space<vmem>>, %arg4: memref<1x1xf32, #tpu.memory_space<vmem>>, %arg5: memref<1x1xf32, #tpu.memory_space<vmem>>, %arg6: memref<4x1xf32, #tpu.memory_space<vmem>>, %arg7: memref<4x1xf32, #tpu.memory_space<vmem>>) attributes {dimension_semantics = [#tpu.dimension_semantics<arbitrary>, #tpu.dimension_semantics<arbitrary>], iteration_bounds = array<i64: 2, 1>, scalar_prefetch = 0 : i64, scratch_operands = 3 : i64, tpu.core_type = #tpu.core_type<tc>, window_params = [{transform_indices = @transform_0, window_bounds = array<i64: 1, 4, 256>}, {transform_indices = @transform_1, window_bounds = array<i64: 1, 1, 256>}, {pipeline_mode = #tpu.pipeline_mode<synchronous>, transform_indices = @transform_2, window_bounds = array<i64: 1, 1>}]} {
    %c0_i32 = arith.constant 0 : i32
    %0 = arith.cmpi eq, %arg0, %c0_i32 : i32
    %c0_i32_0 = arith.constant 0 : i32
    %1 = arith.cmpi eq, %arg1, %c0_i32_0 : i32
    %2 = arith.andi %0, %1 : i1
    %3 = arith.extui %2 : i1 to i32
    %c0_i32_1 = arith.constant 0 : i32
    %4 = arith.cmpi ne, %3, %c0_i32_1 : i32
    scf.if %4 {
      %cst_26 = arith.constant 0.000000e+00 : f32
      %54 = vector.broadcast %cst_26 : f32 to vector<1x1xf32>
      %c0_27 = arith.constant 0 : index
      %c0_28 = arith.constant 0 : index
      %55 = vector.load %arg5[%c0_27, %c0_28] : memref<1x1xf32, #tpu.memory_space<vmem>>, vector<1x1xf32>
      tpu.vector_store %arg5[%c0_27, %c0_28], %54 {strides = array<i32>} : memref<1x1xf32, #tpu.memory_space<vmem>>, vector<1x1xf32>,
      %cst_29 = arith.constant 0.000000e+00 : f32
      %56 = vector.broadcast %cst_29 : f32 to vector<4x1xf32>
      %c0_30 = arith.constant 0 : index
      %c0_31 = arith.constant 0 : index
      %57 = vector.load %arg6[%c0_30, %c0_31] : memref<4x1xf32, #tpu.memory_space<vmem>>, vector<4x1xf32>
      tpu.vector_store %arg6[%c0_30, %c0_31], %56 {strides = array<i32>} : memref<4x1xf32, #tpu.memory_space<vmem>>, vector<4x1xf32>,
      %cst_32 = arith.constant 0.000000e+00 : f32
      %58 = vector.broadcast %cst_32 : f32 to vector<4x1xf32>
      %c0_33 = arith.constant 0 : index
      %c0_34 = arith.constant 0 : index
      %59 = vector.load %arg7[%c0_33, %c0_34] : memref<4x1xf32, #tpu.memory_space<vmem>>, vector<4x1xf32>
      tpu.vector_store %arg7[%c0_33, %c0_34], %58 {strides = array<i32>} : memref<4x1xf32, #tpu.memory_space<vmem>>, vector<4x1xf32>,
    } else {
    }
    %c0 = arith.constant 0 : index
    %c0_2 = arith.constant 0 : index
    %c0_3 = arith.constant 0 : index
    %5 = vector.load %arg2[%c0, %c0_2, %c0_3] : memref<1x4x256xf32, #tpu.memory_space<vmem>>, vector<1x4x256xf32>
    %6 = vector.shape_cast %5 : vector<1x4x256xf32> to vector<4x256xf32>
    %c0_4 = arith.constant 0 : index
    %c0_5 = arith.constant 0 : index
    %c0_6 = arith.constant 0 : index
    %7 = vector.load %arg3[%c0_4, %c0_5, %c0_6] : memref<1x1x256xi32, #tpu.memory_space<vmem>>, vector<1x1x256xi32>
    %8 = vector.shape_cast %7 : vector<1x1x256xi32> to vector<1x256xi32>
    %9 = tpu.iota {dimensions = array<i32: 0>} : vector<4x256xi32>
    %10 = vector.broadcast %8 : vector<1x256xi32> to vector<4x256xi32>
    %11 = arith.cmpi eq, %9, %10 : vector<4x256xi32>
    %12 = arith.extui %11 : vector<4x256xi1> to vector<4x256xi32>
    %13 = arith.sitofp %12 : vector<4x256xi32> to vector<4x256xf32>
    %cst = arith.constant dense<0xFF800000> : vector<256xf32>
    %14 = vector.multi_reduction <maximumf>, %6, %cst [0] : vector<4x256xf32> to vector<256xf32>
    %15 = vector.shape_cast %14 : vector<256xf32> to vector<1x256xf32>
    %16 = vector.broadcast %15 : vector<1x256xf32> to vector<4x256xf32>
    %17 = arith.subf %6, %16 : vector<4x256xf32>
    %18 = math.exp %17 : vector<4x256xf32>
    %cst_7 = arith.constant dense<0.000000e+00> : vector<256xf32>
    %19 = vector.multi_reduction <add>, %18, %cst_7 [0] : vector<4x256xf32> to vector<256xf32>
    %20 = vector.shape_cast %19 : vector<256xf32> to vector<1x256xf32>
    %21 = tpu.reciprocal %20 : vector<1x256xf32> -> vector<1x256xf32>
    %22 = math.log %20 : vector<1x256xf32>
    %23 = vector.broadcast %21 : vector<1x256xf32> to vector<4x256xf32>
    %24 = arith.mulf %18, %23 : vector<4x256xf32>
    %25 = arith.mulf %13, %17 : vector<4x256xf32>
    %cst_8 = arith.constant dense<0.000000e+00> : vector<256xf32>
    %26 = vector.multi_reduction <add>, %25, %cst_8 [0] : vector<4x256xf32> to vector<256xf32>
    %27 = vector.shape_cast %26 : vector<256xf32> to vector<1x256xf32>
    %28 = arith.subf %22, %27 : vector<1x256xf32>
    %c0_9 = arith.constant 0 : index
    %c0_10 = arith.constant 0 : index
    %29 = vector.load %arg5[%c0_9, %c0_10] : memref<1x1xf32, #tpu.memory_space<vmem>>, vector<1x1xf32>
    %30 = vector.shape_cast %28 : vector<1x256xf32> to vector<1x1x256xf32>
    %cst_11 = arith.constant dense<0.000000e+00> : vector<1xf32>
    %31 = vector.multi_reduction <add>, %30, %cst_11 [1, 2] : vector<1x1x256xf32> to vector<1xf32>
    %32 = vector.shape_cast %31 : vector<1xf32> to vector<1x1x1xf32>
    %33 = vector.extract %32[0, 0, 0] : f32 from vector<1x1x1xf32>
    %34 = vector.broadcast %33 : f32 to vector<1x1xf32>
    %35 = arith.addf %29, %34 : vector<1x1xf32>
    %c0_12 = arith.constant 0 : index
    %c0_13 = arith.constant 0 : index
    %36 = vector.load %arg5[%c0_12, %c0_13] : memref<1x1xf32, #tpu.memory_space<vmem>>, vector<1x1xf32>
    tpu.vector_store %arg5[%c0_12, %c0_13], %35 {strides = array<i32>} : memref<1x1xf32, #tpu.memory_space<vmem>>, vector<1x1xf32>,
    %c0_14 = arith.constant 0 : index
    %c0_15 = arith.constant 0 : index
    %37 = vector.load %arg6[%c0_14, %c0_15] : memref<4x1xf32, #tpu.memory_space<vmem>>, vector<4x1xf32>
    %38 = arith.mulf %24, %13 : vector<4x256xf32>
    %cst_16 = arith.constant dense<0.000000e+00> : vector<4xf32>
    %39 = vector.multi_reduction <add>, %38, %cst_16 [1] : vector<4x256xf32> to vector<4xf32>
    %40 = vector.shape_cast %39 : vector<4xf32> to vector<4x1xf32>
    %41 = arith.addf %37, %40 : vector<4x1xf32>
    %c0_17 = arith.constant 0 : index
    %c0_18 = arith.constant 0 : index
    %42 = vector.load %arg6[%c0_17, %c0_18] : memref<4x1xf32, #tpu.memory_space<vmem>>, vector<4x1xf32>
    tpu.vector_store %arg6[%c0_17, %c0_18], %41 {strides = array<i32>} : memref<4x1xf32, #tpu.memory_space<vmem>>, vector<4x1xf32>,
    %c0_19 = arith.constant 0 : index
    %c0_20 = arith.constant 0 : index
    %43 = vector.load %arg7[%c0_19, %c0_20] : memref<4x1xf32, #tpu.memory_space<vmem>>, vector<4x1xf32>
    %44 = arith.addf %24, %13 : vector<4x256xf32>
    %cst_21 = arith.constant dense<0.000000e+00> : vector<4xf32>
    %45 = vector.multi_reduction <add>, %44, %cst_21 [1] : vector<4x256xf32> to vector<4xf32>
    %46 = vector.shape_cast %45 : vector<4xf32> to vector<4x1xf32>
    %47 = arith.addf %43, %46 : vector<4x1xf32>
    %c0_22 = arith.constant 0 : index
    %c0_23 = arith.constant 0 : index
    %48 = vector.load %arg7[%c0_22, %c0_23] : memref<4x1xf32, #tpu.memory_space<vmem>>, vector<4x1xf32>
    tpu.vector_store %arg7[%c0_22, %c0_23], %47 {strides = array<i32>} : memref<4x1xf32, #tpu.memory_space<vmem>>, vector<4x1xf32>,
    %c1_i32 = arith.constant 1 : i32
    %49 = arith.cmpi eq, %arg0, %c1_i32 : i32
    %c0_i32_24 = arith.constant 0 : i32
    %50 = arith.cmpi eq, %arg1, %c0_i32_24 : i32
    %51 = arith.andi %49, %50 : i1
    %52 = arith.extui %51 : i1 to i32
    %c0_i32_25 = arith.constant 0 : i32
    %53 = arith.cmpi ne, %52, %c0_i32_25 : i32
    scf.if %53 {
      %c0_26 = arith.constant 0 : index
      %c0_27 = arith.constant 0 : index
      %54 = vector.load %arg6[%c0_26, %c0_27] : memref<4x1xf32, #tpu.memory_space<vmem>>, vector<4x1xf32>
      %cst_28 = arith.constant 2.000000e+00 : f32
      %55 = vector.broadcast %cst_28 : f32 to vector<4x1xf32>
      %56 = arith.mulf %55, %54 : vector<4x1xf32>
      %cst_29 = arith.constant 9.99999997E-7 : f32
      %57 = vector.broadcast %cst_29 : f32 to vector<4x1xf32>
      %58 = arith.addf %56, %57 : vector<4x1xf32>
      %c0_30 = arith.constant 0 : index
      %c0_31 = arith.constant 0 : index
      %59 = vector.load %arg7[%c0_30, %c0_31] : memref<4x1xf32, #tpu.memory_space<vmem>>, vector<4x1xf32>
      %cst_32 = arith.constant 9.99999997E-7 : f32
      %60 = vector.broadcast %cst_32 : f32 to vector<4x1xf32>
      %61 = arith.addf %59, %60 : vector<4x1xf32>
      %62 = arith.divf %58, %61 : vector<4x1xf32>
      %63 = vector.shape_cast %62 : vector<4x1xf32> to vector<1x4x1xf32>
      %cst_33 = arith.constant dense<0.000000e+00> : vector<1xf32>
      %64 = vector.multi_reduction <add>, %63, %cst_33 [1, 2] : vector<1x4x1xf32> to vector<1xf32>
      %65 = vector.shape_cast %64 : vector<1xf32> to vector<1x1x1xf32>
      %66 = vector.extract %65[0, 0, 0] : f32 from vector<1x1x1xf32>
      %cst_34 = arith.constant 4.000000e+00 : f32
      %67 = arith.divf %66, %cst_34 : f32
      %cst_35 = arith.constant 1.000000e+00 : f32
      %68 = arith.subf %cst_35, %67 : f32
      %c0_36 = arith.constant 0 : index
      %c0_37 = arith.constant 0 : index
      %69 = vector.load %arg5[%c0_36, %c0_37] : memref<1x1xf32, #tpu.memory_space<vmem>>, vector<1x1xf32>
      %cst_38 = arith.constant 5.120000e+02 : f32
      %70 = vector.broadcast %cst_38 : f32 to vector<1x1xf32>
      %71 = arith.divf %69, %70 : vector<1x1xf32>
      %cst_39 = arith.constant 2.000000e-01 : f32
      %72 = vector.broadcast %cst_39 : f32 to vector<1x1xf32>
      %73 = arith.mulf %72, %71 : vector<1x1xf32>
      %cst_40 = arith.constant 8.000000e-01 : f32
      %74 = arith.mulf %cst_40, %68 : f32
      %75 = vector.broadcast %74 : f32 to vector<1x1xf32>
      %76 = arith.addf %73, %75 : vector<1x1xf32>
      %c0_41 = arith.constant 0 : index
      %c0_42 = arith.constant 0 : index
      %77 = vector.load %arg4[%c0_41, %c0_42] : memref<1x1xf32, #tpu.memory_space<vmem>>, vector<1x1xf32>
      tpu.vector_store %arg4[%c0_41, %c0_42], %76 {strides = array<i32>} : memref<1x1xf32, #tpu.memory_space<vmem>>, vector<1x1xf32>,
    } else {
    }
    return
  }
  func.func @transform_0(%arg0: i32, %arg1: i32) -> (i32, i32, i32) {
    %c0_i32 = arith.constant 0 : i32
    %c0_i32_0 = arith.constant 0 : i32
    return %arg0, %c0_i32, %arg1 : i32, i32, i32
  }
  func.func @transform_1(%arg0: i32, %arg1: i32) -> (i32, i32, i32) {
    %c0_i32 = arith.constant 0 : i32
    %c0_i32_0 = arith.constant 0 : i32
    return %arg0, %c0_i32, %arg1 : i32, i32, i32
  }
  func.func @transform_2(%arg0: i32, %arg1: i32) -> (i32, i32) {
    %c0_i32 = arith.constant 0 : i32
    %c0_i32_0 = arith.constant 0 : i32
    %c0_i32_1 = arith.constant 0 : i32
    return %c0_i32, %c0_i32_0 : i32, i32
  }
}

</mosaic_0001>

<llo_original>
// kernel: tpu_custom_call.1
$region0: #{tpu_custom_call.1}
  #allocation0 [shape = 'u32[]', space=smem, size = 0x4, offset = 0x4, fixed_abs, tag = 'smem constant byte address 0x4 - core index']
  #allocation1 [shape = 'u32[144,128]{1,0:T(1,128)}', space=vmem, size = 0x12000, scoped, tag = 'internal scratch']
  #allocation2 [shape = 'f32[1,1]{1,0:T(1,128)}', space=vmem, size = 0x200, scoped, tag = 'scratch operand']
  #allocation3 [shape = 'f32[4,1]{1,0:T(4,128)}', space=vmem, size = 0x800, scoped, tag = 'scratch operand']
  #allocation4 [shape = 'f32[4,1]{1,0:T(4,128)}', space=vmem, size = 0x800, scoped, tag = 'scratch operand']
  %s0 = inlined_call_operand.hbm [shape: f32[2,4,256], index: 0, kind: input, shape index: {}]
  %s1 = inlined_call_operand.hbm [shape: s32[2,1,256], index: 1, kind: input, shape index: {}]
  %s2 = inlined_call_operand.hbm [shape: f32[1,1], index: 2, kind: output, shape index: {}]
  %s3 = sld [smem:[#allocation0]]
  $region57: #{tpu_custom_call.1} parent=0
    _
  %s5 = ssub.s32 1, %s3
  %s6 = scalar_select 0, %s5, %s3
  $region1: #{tpu_custom_call.1} parent=0
    #allocation5 [shape = 'u8[8192]{0}', space=vmem, size = 0x2000, scoped, tag = 'input window, operand 0']
    #allocation6 [shape = 's32[2]{0}', space=sflag, size = 0x8, scoped, tag = 'scoped memory for tpu_custom_call.1']
    #allocation7 [shape = 's32[2]{0}', space=sflag, size = 0x8, scoped, tag = 'scoped memory for tpu_custom_call.1']
    #allocation8 [shape = 'u8[2048]{0}', space=vmem, size = 0x800, scoped, tag = 'input window, operand 1']
    #allocation9 [shape = 's32[2]{0}', space=sflag, size = 0x8, scoped, tag = 'scoped memory for tpu_custom_call.1']
    #allocation10 [shape = 'u8[512]{0}', space=vmem, size = 0x400, scoped, tag = 'output window, operand 0, single buffered']
    %7 = vsyncpa [#allocation6], 0
    %s8 = scalar_lea.sflag [#allocation6], 1
    %9 = vsyncpa %s8, 0
    %10 = vsyncpa [#allocation9], 0
    %s11 = scalar_lea.sflag [#allocation9], 1
    %12 = vsyncpa %s11, 0
    %13 = vsyncpa [#allocation7], 0
    loop: start=0, step=1, limit=4
    $region2: #{tpu_custom_call.1} parent=1 // loop_pre_header
      _
    $region3: #{tpu_custom_call.1} parent=1 // loop_header
      %s15 = sphi 0, %s19
      %p16 = scmp.ge.s32.totalorder %s15, 4
      %s22 = sphi 0, %s34
      %s23 = sphi 0, %s30
      %s24 = sphi 0, %s22
      %s25 = sphi 0, %s23
      %s26 = sphi 0, %s24
      %s27 = sphi 0, %s25
      %s39 = sphi 0, %s41
      %s42 = sphi 0, %s39
      %s43 = sphi 0, %s42
      %s59 = sphi 0, %s43
      %s67 = sphi 0, %s69
      %s70 = sphi 0, %s67
      %s71 = sphi 0, %s70
      %s87 = sphi 0, %s71
      %s91 = sphi 0, %s91
      %s93 = sphi 0, %s91
      %s94 = sphi 0, %s93
      %s108 = sphi 0, %s94
    $region4: #{tpu_custom_call.1} parent=1 // loop_header_branch
      %18 = sbr.rel (%p16) target = $region8
    $region5: #{tpu_custom_call.1} parent=1 // loop_body
      %s20 = ssub.s32 %s15, 1
      %s21 = ssub.s32 %s15, 2
      %s28 = sadd.s32 1, %s23
      %p29 = scmp.ge.s32.totalorder %s28, 1
      %s30 = scalar_select %p29, 0, %s28
      %s31 = sadd.s32 1, %s22
      %s32 = scalar_select %p29, %s31, %s22
      %p33 = scmp.ge.s32.totalorder %s32, 2
      %s34 = scalar_select %p33, 0, %s32
      %s35 = ssub.s32 %s22, %s34
      %s36 = ssub.s32 %s23, %s30
      %s37 = sor.u32 %s35, %s36
      %p38 = scmp.eq.s32.totalorder %s37, 0
      %s40 = sadd.s32 %s39, 1
      %s41 = scalar_select %p38, %s39, %s40
      %p44 = pneg %p38
      %p45 = scmp.eq.s32.totalorder %s15, 1
      %p46 = por %p44, %p45
      %p47 = scmp.ne.s32.totalorder %s39, %s42
      %p48 = scmp.eq.s32.totalorder %s15, 0
      %p49 = por %p47, %p48
      %p50 = scmp.ne.s32.totalorder %s39, %s42
      %p51 = scmp.eq.s32.totalorder %s20, 1
      %p52 = por %p50, %p51
      %p53 = scmp.ne.s32.totalorder %s42, %s43
      %p54 = scmp.eq.s32.totalorder %s20, 0
      %p55 = por %p53, %p54
      %p56 = scmp.ne.s32.totalorder %s42, %s43
      %p57 = scmp.eq.s32.totalorder %s21, 1
      %p58 = por %p56, %p57
      %p60 = scmp.ne.s32.totalorder %s43, %s59
      %p61 = scmp.eq.s32.totalorder %s21, 0
      %p62 = por %p60, %p61
      %s63 = ssub.s32 %s22, %s34
      %s64 = ssub.s32 %s23, %s30
      %s65 = sor.u32 %s63, %s64
      %p66 = scmp.eq.s32.totalorder %s65, 0
      %s68 = sadd.s32 %s67, 1
      %s69 = scalar_select %p66, %s67, %s68
      %p72 = pneg %p66
      %p73 = scmp.eq.s32.totalorder %s15, 1
      %p74 = por %p72, %p73
      %p75 = scmp.ne.s32.totalorder %s67, %s70
      %p76 = scmp.eq.s32.totalorder %s15, 0
      %p77 = por %p75, %p76
      %p78 = scmp.ne.s32.totalorder %s67, %s70
      %p79 = scmp.eq.s32.totalorder %s20, 1
      %p80 = por %p78, %p79
      %p81 = scmp.ne.s32.totalorder %s70, %s71
      %p82 = scmp.eq.s32.totalorder %s20, 0
      %p83 = por %p81, %p82
      %p84 = scmp.ne.s32.totalorder %s70, %s71
      %p85 = scmp.eq.s32.totalorder %s21, 1
      %p86 = por %p84, %p85
      %p88 = scmp.ne.s32.totalorder %s71, %s87
      %p89 = scmp.eq.s32.totalorder %s21, 0
      %p90 = por %p88, %p89
      %s92 = sadd.s32 %s91, 1
      %p95 = scmp.eq.s32.totalorder %s15, 1
      %p96 = scmp.ne.s32.totalorder %s91, %s93
      %p97 = scmp.eq.s32.totalorder %s15, 0
      %p98 = por %p96, %p97
      %p99 = scmp.ne.s32.totalorder %s91, %s93
      %p100 = scmp.eq.s32.totalorder %s20, 1
      %p101 = por %p99, %p100
      %p102 = scmp.ne.s32.totalorder %s93, %s94
      %p103 = scmp.eq.s32.totalorder %s20, 0
      %p104 = por %p102, %p103
      %p105 = scmp.ne.s32.totalorder %s93, %s94
      %p106 = scmp.eq.s32.totalorder %s21, 1
      %p107 = por %p105, %p106
      %p109 = scmp.ne.s32.totalorder %s94, %s108
      %p110 = scmp.eq.s32.totalorder %s21, 0
      %p111 = por %p109, %p110
      %p112 = scmp.le.s32.totalorder 1, %s15
      %p113 = scmp.lt.s32.totalorder %s15, 3
      %p114 = pnand %p112, %p113
      %p115 = pneg %p114
      // Predicated region
      $region9: #{tpu_custom_call.1} parent=5 // pred_check
        _
      $region10: #{tpu_custom_call.1} parent=5 // pred_check_branch
        %117 = sbr.rel (%p114) target = $region12
      $region11: #{tpu_custom_call.1} parent=5 // pred_region
        %s118 = ssub.s32 %s15, 1
      $region12: #{tpu_custom_call.1} parent=5 // pred_fallthru
        _
      %p119 = scmp.lt.s32.totalorder %s15, 2
      // Predicated region
      $region13: #{tpu_custom_call.1} parent=5 // pred_check
        %p120 = pneg %p119
      $region14: #{tpu_custom_call.1} parent=5 // pred_check_branch
        %122 = sbr.rel (%p120) target = $region16
      $region15: #{tpu_custom_call.1} parent=5 // pred_region
        // Predicated region
        $region17: #{tpu_custom_call.1} parent=15 // pred_check
          %p123 = pneg %p49
        $region18: #{tpu_custom_call.1} parent=15 // pred_check_branch
          %125 = sbr.rel (%p123) target = $region20
        $region19: #{tpu_custom_call.1} parent=15 // pred_region
          %s126 = sand.u32 %s39, 1
          %s127 = scalar_lea.sflag [#allocation6], %s126
          %s128 = sand.u32 %s39, 1
          %s129 = smul.addr %s128, 8
          %s130 = scalar_lea.vmem [#allocation5], %s129
          %s131 = smul.u32 2, %s23
          %s133 = ssub.s32 128, 128
          %134 = vsyncadd %s127, %s133
          %s135 = smul.addr %s22, 2
          %s136 = sadd.s32 %s131, %s135
          %s137 = smul.addr %s136, 64
          %s138 = scalar_lea.hbm %s0, %s137
          %s140 = sshll.u32 %s130, 4
          %s141 = int_to_ptr.vmem [resolvable:$true] %s140
          %143 = dma.hbm_to_vmem [thread:$0]  %s138, 128, %s141, %s127
        $region20: #{tpu_custom_call.1} parent=15 // pred_fallthru
          _
        // Predicated region
        $region21: #{tpu_custom_call.1} parent=15 // pred_check
          %p144 = pneg %p77
        $region22: #{tpu_custom_call.1} parent=15 // pred_check_branch
          %146 = sbr.rel (%p144) target = $region24
        $region23: #{tpu_custom_call.1} parent=15 // pred_region
          %s147 = sand.u32 %s67, 1
          %s148 = scalar_lea.sflag [#allocation9], %s147
          %s149 = sand.u32 %s67, 1
          %s150 = smul.addr %s149, 2
          %s151 = scalar_lea.vmem [#allocation8], %s150
          %s152 = smul.u32 2, %s23
          %s154 = ssub.s32 32, 32
          %155 = vsyncadd %s148, %s154
          %s156 = smul.addr %s22, 2
          %s157 = sadd.s32 %s152, %s156
          %s158 = smul.addr %s157, 16
          %s159 = scalar_lea.hbm %s1, %s158
          %s161 = sshll.u32 %s151, 4
          %s162 = int_to_ptr.vmem [resolvable:$true] %s161
          %164 = dma.hbm_to_vmem [thread:$0]  %s159, 32, %s162, %s148
        $region24: #{tpu_custom_call.1} parent=15 // pred_fallthru
          _
      $region16: #{tpu_custom_call.1} parent=5 // pred_fallthru
        _
      %p165 = scmp.le.s32.totalorder 1, %s15
      %p166 = scmp.lt.s32.totalorder %s15, 3
      %p167 = pnand %p165, %p166
      %p168 = pneg %p167
      // Predicated region
      $region25: #{tpu_custom_call.1} parent=5 // pred_check
        _
      $region26: #{tpu_custom_call.1} parent=5 // pred_check_branch
        %170 = sbr.rel (%p167) target = $region28
      $region27: #{tpu_custom_call.1} parent=5 // pred_region
        %s171 = ssub.s32 %s15, 1
        %s172 = sand.u32 %s42, 1
        %s173 = scalar_lea.sflag [#allocation6], %s172
        %s174 = sand.u32 %s42, 1
        %s175 = smul.addr %s174, 8
        %s176 = scalar_lea.vmem [#allocation5], %s175
        // Predicated region
        $region29: #{tpu_custom_call.1} parent=27 // pred_check
          %p177 = pneg %p55
        $region30: #{tpu_custom_call.1} parent=27 // pred_check_branch
          %179 = sbr.rel (%p177) target = $region32
        $region31: #{tpu_custom_call.1} parent=27 // pred_region
          %180 = dma.done %s173, 128
        $region32: #{tpu_custom_call.1} parent=27 // pred_fallthru
          _
        %s181 = sand.u32 %s70, 1
        %s182 = scalar_lea.sflag [#allocation9], %s181
        %s183 = sand.u32 %s70, 1
        %s184 = smul.addr %s183, 2
        %s185 = scalar_lea.vmem [#allocation8], %s184
        // Predicated region
        $region33: #{tpu_custom_call.1} parent=27 // pred_check
          %p186 = pneg %p83
        $region34: #{tpu_custom_call.1} parent=27 // pred_check_branch
          %188 = sbr.rel (%p186) target = $region36
        $region35: #{tpu_custom_call.1} parent=27 // pred_region
          %189 = dma.done %s182, 32
        $region36: #{tpu_custom_call.1} parent=27 // pred_fallthru
          _
        %s190 = sand.u32 %s42, 1
        %s191 = scalar_lea.sflag [#allocation6], %s190
        %s192 = sand.u32 %s42, 1
        %s193 = smul.addr %s192, 8
        %s194 = scalar_lea.vmem [#allocation5], %s193
        %p195 = pneg %p55
        %p196 = pneg %p52
        %s197 = sand.u32 %s70, 1
        %s198 = scalar_lea.sflag [#allocation9], %s197
        %s199 = sand.u32 %s70, 1
        %s200 = smul.addr %s199, 2
        %s201 = scalar_lea.vmem [#allocation8], %s200
        %p202 = pneg %p83
        %p203 = pneg %p80
        %p204 = pneg %p104
        %p205 = pneg %p101
        %s206 = smul.u32 2, %s25
        %s207 = smul.u32 2, %s25
        %p208 = scmp.eq.s32.totalorder %s24, 0
        %p209 = scmp.eq.s32.totalorder %s25, 0
        %p210 = pnand %p208, %p209
        %p211 = pneg %p210
        // Predicated region
        $region37: #{tpu_custom_call.1} parent=27 // pred_check
          _
        $region38: #{tpu_custom_call.1} parent=27 // pred_check_branch
          %213 = sbr.rel (%p210) target = $region40
        $region39: #{tpu_custom_call.1} parent=27 // pred_region
          %vm214 = vcmask 0
          %215 = vst.msk [vmem:[#allocation2] sm:$0x1] %vm214, 0.0
          %vm216 = vcmask 3072
          %217 = vst.msk [vmem:[#allocation3] sm:$0xf] %vm216, 0.0
          %218 = vst.msk [vmem:[#allocation4] sm:$0xf] %vm216, 0.0
        $region40: #{tpu_custom_call.1} parent=27 // pred_fallthru
          _
        %v219 = vld [vmem:[%s176] sm:$0xff]
        %v220 = vld [vmem:[%s185] sm:$0x3]
        %v221 = vlaneseq
        %v222 = vshrl.u32 %v221, 7
        %v223 = vlaneseq
        %v224 = vshrl.u32 %v223, 7
        %v225 = vsub.s32 0, %v224
        %v226 = vrot.slane %v220, %v225
        %v227 = vlaneseq
        %v228 = vshrl.u32 %v227, 7
        %v229 = vsub.s32 1, %v228
        %v230 = vrot.slane %v220, %v229
        %vm231 = vcmp.eq.s32.totalorder %v222, %v226
        %vm232 = vcmp.eq.s32.totalorder %v222, %v230
        %v233 = vsel %vm231, 1, 0
        %v234 = vsel %vm232, 1, 0
        %v235 = vcvt.s32.f32 %v233
        %v236 = vcvt.s32.f32 %v234
        %v238 = vcombine.high %v219, %v219
        %vm240 = vcmask 1043456
        %v241 = vsel %vm240, %v219, -inf
        %v242 = vrot.slane %v241, 4
        %v243 = vmax.f32 %v241, %v242
        %v244 = vrot.slane %v243, 2
        %v245 = vmax.f32 %v243, %v244
        %v246 = vrot.slane %v245, 1
        %v247 = vmax.f32 %v245, %v246
        %v248 = vsel %vm240, %v238, -inf
        %v249 = vrot.slane %v248, 4
        %v250 = vmax.f32 %v248, %v249
        %v251 = vrot.slane %v250, 2
        %v252 = vmax.f32 %v250, %v251
        %v253 = vrot.slane %v252, 1
        %v254 = vmax.f32 %v252, %v253
        %v257 = vcombine.low %v247, %v254
        %v259 = vsub.f32 %v219, %v257
        %v260 = vmul.f32 %v259, 1.442695
        %v261 = vpow.pop %v260
        %v263 = vcombine.high %v261, %v261
        %v265 = vsel %vm240, %v261, 0.0
        %v266 = vrot.slane %v265, 4
        %v267 = vadd.f32 %v265, %v266
        %v268 = vrot.slane %v267, 2
        %v269 = vadd.f32 %v267, %v268
        %v270 = vrot.slane %v269, 1
        %v271 = vadd.f32 %v269, %v270
        %v272 = vsel %vm240, %v263, 0.0
        %v273 = vrot.slane %v272, 4
        %v274 = vadd.f32 %v272, %v273
        %v275 = vrot.slane %v274, 2
        %v276 = vadd.f32 %v274, %v275
        %v277 = vrot.slane %v276, 1
        %v278 = vadd.f32 %v276, %v277
        %v279 = vrcp.pop %v271
        %v280 = vrcp.pop %v278
        %v281 = vlog2.pop %v271
        %v282 = vmul.f32 %v281, 0.6931472
        %v283 = vlog2.pop %v278
        %v284 = vmul.f32 %v283, 0.6931472
        %v287 = vcombine.low %v279, %v280
        %v289 = vmul.f32 %v261, %v287
        %v291 = vcombine.high %v259, %v259
        %v293 = vmul.f32 %v235, %v259
        %v294 = vmul.f32 %v236, %v291
        %v295 = vsel %vm240, %v293, 0.0
        %v296 = vrot.slane %v295, 4
        %v297 = vadd.f32 %v295, %v296
        %v298 = vrot.slane %v297, 2
        %v299 = vadd.f32 %v297, %v298
        %v300 = vrot.slane %v299, 1
        %v301 = vadd.f32 %v299, %v300
        %v302 = vsel %vm240, %v294, 0.0
        %v303 = vrot.slane %v302, 4
        %v304 = vadd.f32 %v302, %v303
        %v305 = vrot.slane %v304, 2
        %v306 = vadd.f32 %v304, %v305
        %v307 = vrot.slane %v306, 1
        %v308 = vadd.f32 %v306, %v307
        %v309 = vsub.f32 %v282, %v301
        %v310 = vsub.f32 %v284, %v308
        %v311 = vld [vmem:[#allocation2] sm:$0x1]
        %vm312 = vcmask 1040384
        %v313 = vsel %vm312, %v309, 0.0
        %v314 = vsel %vm312, %v310, 0.0
        %v315 = vadd.f32 %v313, %v314
        %316 = vadd.xlane.f32.xlu0 %v315
        %v317 = vpop.xlane.xlu0 %316
        %v318 = vrot.slane %v317, 4
        %v319 = vadd.f32 %v317, %v318
        %v320 = vrot.slane %v319, 2
        %v321 = vadd.f32 %v319, %v320
        %v322 = vrot.slane %v321, 1
        %v323 = vadd.f32 %v321, %v322
        %s324 = vtos %v323
        %v325 = vstv %s324
        %v326 = vadd.f32 %v311, %v325
        %vm327 = vcmask 0
        %328 = vst.msk [vmem:[#allocation2] sm:$0x1] %vm327, %v326
        %v329 = vld [vmem:[#allocation3] sm:$0xf]
        %v332 = vcombine.low %v235, %v236
        %v334 = vmul.f32 %v289, %v332
        %v336 = vcombine.high %v334, %v334
        %v338 = vsel %vm240, %v334, 0.0
        %v339 = vsel %vm240, %v336, 0.0
        %v340 = vadd.f32 %v338, %v339
        %341 = vadd.xlane.f32.xlu0 %v340
        %v342 = vpop.xlane.xlu0 %341
        %v343 = vadd.f32 %v329, %v342
        %vm344 = vcmask 3072
        %345 = vst.msk [vmem:[#allocation3] sm:$0xf] %vm344, %v343
        %v346 = vld [vmem:[#allocation4] sm:$0xf]
        %v347 = vadd.f32 %v289, %v332
        %v349 = vcombine.high %v347, %v347
        %v351 = vsel %vm240, %v347, 0.0
        %v352 = vsel %vm240, %v349, 0.0
        %v353 = vadd.f32 %v351, %v352
        %354 = vadd.xlane.f32.xlu0 %v353
        %v355 = vpop.xlane.xlu0 %354
        %v356 = vadd.f32 %v346, %v355
        %357 = vst.msk [vmem:[#allocation4] sm:$0xf] %vm344, %v356
        %p358 = scmp.eq.s32.totalorder %s24, 1
        %p359 = pnand %p358, %p209
        %p360 = pneg %p359
        // Predicated region
        $region41: #{tpu_custom_call.1} parent=27 // pred_check
          _
        $region42: #{tpu_custom_call.1} parent=27 // pred_check_branch
          %362 = sbr.rel (%p359) target = $region44
        $region43: #{tpu_custom_call.1} parent=27 // pred_region
          %v363 = vld [vmem:[#allocation3] sm:$0xf]
          %v364 = vmul.f32 %v363, 2.0
          %v365 = vadd.f32 %v364, 1e-06
          %v366 = vld [vmem:[#allocation4] sm:$0xf]
          %v367 = vadd.f32 %v366, 1e-06
          %v368 = vrcp.pop %v367
          %v369 = vmul.f32 %v365, %v368
          %v370 = vsel %vm344, %v369, 0.0
          %371 = vadd.xlane.f32.xlu0 %v370
          %v372 = vpop.xlane.xlu0 %371
          %v373 = vrot.slane %v372, 4
          %v374 = vadd.f32 %v372, %v373
          %v375 = vrot.slane %v374, 2
          %v376 = vadd.f32 %v374, %v375
          %v377 = vrot.slane %v376, 1
          %v378 = vadd.f32 %v376, %v377
          %s379 = vtos %v378
          %v380 = vrcp.pop 4.0
          %s381 = vtos %v380
          %s382 = smul.f32 %s379, %s381
          %s383 = ssub.f32 1.0, %s382
          %v384 = vld [vmem:[#allocation2] sm:$0x1]
          %v385 = vrcp.pop 512.0
          %v386 = vmul.f32 %v384, %v385
          %v387 = vmul.f32 %v386, 0.2
          %s388 = smul.f32 %s383, 0.8
          %v389 = vstv %s388
          %v390 = vadd.f32 %v387, %v389
          %391 = vst.msk [vmem:[#allocation10] sm:$0x1] %vm327, %v390
        $region44: #{tpu_custom_call.1} parent=27 // pred_fallthru
          _
        // Predicated region
        $region45: #{tpu_custom_call.1} parent=27 // pred_check
          %p392 = pneg %p101
        $region46: #{tpu_custom_call.1} parent=27 // pred_check_branch
          %394 = sbr.rel (%p392) target = $region48
        $region47: #{tpu_custom_call.1} parent=27 // pred_region
          %s396 = ssub.s32 16, 16
          %397 = vsyncadd [#allocation7], %s396
          %s399 = sshll.u32 [#allocation10], 4
          %s400 = int_to_ptr.vmem [resolvable:$true] %s399
          %402 = dma.vmem_to_hbm [thread:$0]  %s400, 16, %s2, [#allocation7]
        $region48: #{tpu_custom_call.1} parent=27 // pred_fallthru
          _
        // Predicated region
        $region49: #{tpu_custom_call.1} parent=27 // pred_check
          %p403 = pneg %p101
        $region50: #{tpu_custom_call.1} parent=27 // pred_check_branch
          %405 = sbr.rel (%p403) target = $region52
        $region51: #{tpu_custom_call.1} parent=27 // pred_region
          %406 = dma.done [#allocation7], 16
        $region52: #{tpu_custom_call.1} parent=27 // pred_fallthru
          _
      $region28: #{tpu_custom_call.1} parent=5 // pred_fallthru
        _
      %p407 = scmp.le.s32.totalorder 2, %s15
      // Predicated region
      $region53: #{tpu_custom_call.1} parent=5 // pred_check
        %p408 = pneg %p407
      $region54: #{tpu_custom_call.1} parent=5 // pred_check_branch
        %410 = sbr.rel (%p408) target = $region56
      $region55: #{tpu_custom_call.1} parent=5 // pred_region
        %s411 = ssub.s32 %s15, 2
      $region56: #{tpu_custom_call.1} parent=5 // pred_fallthru
        _
    $region6: #{tpu_custom_call.1} parent=1 // loop_footer
      %s19 = sadd.s32 1, %s15
    $region7: #{tpu_custom_call.1} parent=1 // loop_footer_branch
      %14 = sbr.rel target = $region3
    $region8: #{tpu_custom_call.1} parent=1 // loop_exit
      _
    %412 = vsyncpa [#allocation6], 1
    %s413 = scalar_lea.sflag [#allocation6], 1
    %414 = vsyncpa %s413, 1
    %415 = vsyncpa [#allocation9], 1
    %s416 = scalar_lea.sflag [#allocation9], 1
    %417 = vsyncpa %s416, 1
    %418 = vsyncpa [#allocation7], 1
    %s419 = scalar_lea.sflag [#allocation7], 1
    %420 = vsyncpa %s419, 1

</llo_original>
